<compile_context>
chip_gen: v7x
topology: tpu7x:2x2x1
jax: 0.10.0
libtpu: 0.0.40
codegen_flags: <defaults>
</compile_context>

<pallas_src>
import functools

import jax
import jax.numpy as jnp
from jax.experimental import pallas as pl
from jax.experimental.pallas import tpu as pltpu


def _round_up(a, b):
    return (a + b - 1) // b * b


def _rnn_kernel(num_layers, compute_dtype,
                x_ref, h_ref, w_ih_ref, w_hp_ref, w_hh_ref, b_pre_ref,
                w_ho_ref, b_ho_ref, out_ref, stored_ref):
    """One M-tile of the forward pass.

    x_ref:      [TM, I]            f32 (cast to bf16 in-kernel)
    h_ref:      [L, TM, H]         f32 (cast to bf16 in-kernel)
    w_ih_ref:   [L, I, H]          bf16   (VMEM-resident)
    w_hp_ref:   [L, H, H]          bf16   (prev-time-step hidden weights)
    w_hh_ref:   [max(L-1,1), H, H] bf16   (h1 -> deeper layers; dummy when L == 1)
    b_pre_ref:  [L, 1, H]          f32    (b_ih + b_hh_prev [+ b_hh])
    w_ho_ref:   [L, H, O]          bf16
    b_ho_ref:   [1, O]             f32    (summed output bias)
    out_ref:    [TM, O]            bf16
    stored_ref: [L, TM, H]         bf16
    """
    cd = compute_dtype
    x = x_ref[...].astype(cd)                       # [TM, I]

    out_acc = None
    h1 = None                                       # layer-0 hidden, reused for ALL deeper layers
    for layer in range(num_layers):                 # static unroll; num_layers is small & static
        h_prev = h_ref[layer].astype(cd)            # [TM, H]
        pre = (jnp.dot(x, w_ih_ref[layer], preferred_element_type=jnp.float32)
               + jnp.dot(h_prev, w_hp_ref[layer], preferred_element_type=jnp.float32)
               + b_pre_ref[layer])
        if layer > 0:
            pre = pre + jnp.dot(h1, w_hh_ref[layer - 1],
                                preferred_element_type=jnp.float32)
        # tanh kept in f32 (works on all chips; bf16 EUP only helps if EUP-bound on v6e/v7x).
        hn = jnp.tanh(pre).astype(cd)               # [TM, H] bf16
        if layer == 0:
            h1 = hn
        stored_ref[layer] = hn.astype(stored_ref.dtype)   # direct [L, M, H] layout write

        contrib = jnp.dot(hn, w_ho_ref[layer], preferred_element_type=jnp.float32)
        out_acc = contrib if out_acc is None else out_acc + contrib

    out_ref[...] = (out_acc + b_ho_ref[...]).astype(out_ref.dtype)


def pack_params(params, num_layers, compute_dtype=jnp.bfloat16):
    """PyTorch-layout per-layer Linears -> kernel layout.  Call ONCE and reuse."""
    L = num_layers
    H = params["w_ih"].shape[1]
    w_ih = jnp.transpose(params["w_ih"], (0, 2, 1)).astype(compute_dtype)        # [L, I, H]
    w_hp = jnp.transpose(params["w_hh_prev"], (0, 2, 1)).astype(compute_dtype)   # [L, H, H]
    if L > 1:
        w_hh = jnp.transpose(params["w_hh"], (0, 2, 1)).astype(compute_dtype)    # [L-1, H, H]
    else:
        w_hh = jnp.zeros((1, H, H), compute_dtype)                               # unused dummy
    b_pre = params["b_ih"] + params["b_hh_prev"]                                 # [L, H]
    if L > 1:
        b_pre = b_pre.at[1:].add(params["b_hh"])
    b_pre = b_pre[:, None, :].astype(jnp.float32)                                # [L, 1, H]
    w_ho = jnp.transpose(params["w_ho"], (0, 2, 1)).astype(compute_dtype)        # [L, H, O]
    b_ho = jnp.sum(params["b_ho"], axis=0, keepdims=True).astype(jnp.float32)    # [1, O]
    return w_ih, w_hp, w_hh, b_pre, w_ho, b_ho


def _vmem_capacity_bytes():
    try:
        return int(pltpu.get_tpu_info().vmem_capacity_bytes)
    except Exception:                               # conservative fallback (v7x: 64 MiB / TC)
        return 64 << 20


def rnn_forward(x, h_states, packed_params, num_layers, *, block_m=None,
                compute_dtype=jnp.bfloat16):
    """x: [B, S, I] f32; h_states: [L, B, S, H] f32; packed_params from pack_params().

    Returns (out [B, S, O] bf16, stored_h [L, B, S, H] bf16).
    """
    B, S, I = x.shape
    L, _, _, H = h_states.shape
    w_ih, w_hp, w_hh, b_pre, w_ho, b_ho = packed_params
    O = w_ho.shape[-1]
    M = B * S

    vmem_cap = _vmem_capacity_bytes()
    if block_m is None:
        # >=2 grid steps so both v7x TensorCores get work and DMA/compute overlap;
        # larger tiles amortize per-step overhead on v5e/v6e's bigger VMEM.
        block_m_cap = 2048 if vmem_cap >= (96 << 20) else 1024
        half = pl.cdiv(M, 2)
        mult = 16 if half >= 16 else 8              # bf16 packs 16 rows / vreg
        block_m = min(block_m_cap, _round_up(half, mult))
    grid = (pl.cdiv(M, block_m),)                   # ragged last block handled by Pallas

    itemsize = jnp.dtype(compute_dtype).itemsize
    weight_bytes = (L * I * H + L * H * H + max(L - 1, 1) * H * H + L * H * O) * itemsize \
        + (L * H + O) * 4
    tile_bytes = block_m * (I + L * H) * 4 + block_m * (O + L * H) * itemsize
    need = 2 * (tile_bytes + weight_bytes)          # double-buffered
    need = int(need * 1.5) + (8 << 20)              # headroom for temporaries
    vmem_limit = int(min(max(need, 16 << 20), 0.5 * vmem_cap, 100 << 20))

    # Free reshapes only; no cast / pad / slice passes in the wrapper.
    x2 = x.reshape(M, I)
    h2 = h_states.reshape(L, M, H)

    kernel = functools.partial(_rnn_kernel, num_layers, compute_dtype)

    flops = 2 * M * (L * (I * H + H * H + H * O) + max(L - 1, 0) * H * H)
    bytes_accessed = (M * (I + L * H) * 4           # f32 inputs
                      + M * (O + L * H) * itemsize  # bf16 outputs
                      + weight_bytes)
    cost = pl.CostEstimate(flops=int(flops),
                           transcendentals=int(M * L * H),
                           bytes_accessed=int(bytes_accessed))

    out, stored = pl.pallas_call(
        kernel,
        out_shape=(jax.ShapeDtypeStruct((M, O), compute_dtype),
                   jax.ShapeDtypeStruct((L, M, H), compute_dtype)),
        grid_spec=pltpu.PrefetchScalarGridSpec(
            num_scalar_prefetch=0,
            grid=grid,
            in_specs=[
                pl.BlockSpec((block_m, I), lambda i: (i, 0)),          # x tile (f32)
                pl.BlockSpec((L, block_m, H), lambda i: (0, i, 0)),    # h_states tile (f32)
                # Weights / biases: full extent, constant block index -> VMEM-resident.
                pl.BlockSpec((L, I, H), lambda i: (0, 0, 0)),
                pl.BlockSpec((L, H, H), lambda i: (0, 0, 0)),
                pl.BlockSpec((max(L - 1, 1), H, H), lambda i: (0, 0, 0)),
                pl.BlockSpec((L, 1, H), lambda i: (0, 0, 0)),
                pl.BlockSpec((L, H, O), lambda i: (0, 0, 0)),
                pl.BlockSpec((1, O), lambda i: (0, 0)),
            ],
            out_specs=(
                pl.BlockSpec((block_m, O), lambda i: (i, 0)),          # out (bf16)
                pl.BlockSpec((L, block_m, H), lambda i: (0, i, 0)),    # stored_h (bf16)
            ),
        ),
        compiler_params=pltpu.CompilerParams(
            dimension_semantics=("parallel",),      # shard M tiles across TCs (v7x)
            vmem_limit_bytes=vmem_limit,
        ),
        cost_estimate=cost,
    )(x2, h2, w_ih, w_hp, w_hh, b_pre, w_ho, b_ho)

    return out.reshape(B, S, O), stored.reshape(L, B, S, H)


def init_params(key, input_size, hidden_size, output_size, num_layers):
    """Deterministic synthetic parameters in PyTorch nn.Linear layout [out, in]."""
    ks = jax.random.split(key, 8)
    L, I, H, O = num_layers, input_size, hidden_size, output_size

    def w(k, shape, fan_in):
        bound = 1.0 / float(fan_in) ** 0.5
        return jax.random.uniform(k, shape, jnp.float32, -bound, bound)

    return {
        "w_ih": w(ks[0], (L, H, I), I), "b_ih": w(ks[1], (L, H), I),              # self.ih
        "w_hh_prev": w(ks[2], (L, H, H), H), "b_hh_prev": w(ks[3], (L, H), H),    # self._hh
        "w_hh": w(ks[4], (max(L - 1, 0), H, H), H),                               # self.hh
        "b_hh": w(ks[5], (max(L - 1, 0), H), H),
        "w_ho": w(ks[6], (L, O, H), H), "b_ho": w(ks[7], (L, O), H),              # self.ho
    }


def rnn_forward_ref(x, h_states, params, num_layers, compute_dtype=jnp.bfloat16):
    """Plain-JAX reference mirroring the PyTorch forward (same operand dtype)."""
    cd = compute_dtype

    def lin(inp, weight, bias):   # weight in PyTorch layout [out, in]
        return jnp.dot(inp.astype(cd), weight.T.astype(cd),
                       preferred_element_type=jnp.float32) + bias

    stored = []
    h1 = None
    for layer in range(num_layers):
        pre = (lin(x, params["w_ih"][layer], params["b_ih"][layer])
               + lin(h_states[layer], params["w_hh_prev"][layer], params["b_hh_prev"][layer]))
        if layer > 0:
            pre = pre + lin(h1, params["w_hh"][layer - 1], params["b_hh"][layer - 1])
        hn = jnp.tanh(pre)
        if layer == 0:
            h1 = hn
        stored.append(hn)
    out = 0.0
    for layer in range(num_layers):
        out = out + lin(stored[layer].astype(cd).astype(jnp.float32),
                        params["w_ho"][layer], params["b_ho"][layer])
    return out, jnp.stack(stored, axis=0)


if __name__ == "__main__":
    batch, seq, input_size, hidden_size, output_size, num_layers = 2, 8, 16, 32, 16, 2

    key = jax.random.PRNGKey(0)
    kx, kh, kp = jax.random.split(key, 3)

    x = jax.random.normal(kx, (batch, seq, input_size), jnp.float32)
    h_states = jax.random.normal(kh, (num_layers, batch, seq, hidden_size), jnp.float32)
    params = init_params(kp, input_size, hidden_size, output_size, num_layers)

    # Pack once (hoisted out of the per-call path), reuse for every forward.
    packed = pack_params(params, num_layers)

    fwd = jax.jit(functools.partial(rnn_forward, num_layers=num_layers))
    out, stored_h = fwd(x, h_states, packed)
    out = jax.block_until_ready(out)
    stored_h = jax.block_until_ready(stored_h)

    out_ref, stored_ref = rnn_forward_ref(x, h_states, params, num_layers)

    assert out.shape == (batch, seq, output_size)
    assert stored_h.shape == (num_layers, batch, seq, hidden_size)
    # Kernel outputs are bf16 (per perf review); compare in f32 with bf16-level tolerance.
    out_f32 = out.astype(jnp.float32)
    stored_f32 = stored_h.astype(jnp.float32)
    assert jnp.allclose(out_f32, out_ref, atol=3e-2, rtol=3e-2), \
        float(jnp.max(jnp.abs(out_f32 - out_ref)))
    assert jnp.allclose(stored_f32, stored_ref, atol=1e-2, rtol=1e-2), \
        float(jnp.max(jnp.abs(stored_f32 - stored_ref)))

    print("KERNEL_OK")
</pallas_src>

<mosaic_0001>
module attributes {stable_mosaic.version = 11 : i64} {
  func.func @_rnn_kernel(%arg0: i32, %arg1: memref<8x16xf32, #tpu.memory_space<vmem>>, %arg2: memref<2x8x32xf32, #tpu.memory_space<vmem>>, %arg3: memref<2x16x32xbf16, #tpu.memory_space<vmem>>, %arg4: memref<2x32x32xbf16, #tpu.memory_space<vmem>>, %arg5: memref<1x32x32xbf16, #tpu.memory_space<vmem>>, %arg6: memref<2x1x32xf32, #tpu.memory_space<vmem>>, %arg7: memref<2x32x16xbf16, #tpu.memory_space<vmem>>, %arg8: memref<1x16xf32, #tpu.memory_space<vmem>>, %arg9: memref<8x16xbf16, #tpu.memory_space<vmem>>, %arg10: memref<2x8x32xbf16, #tpu.memory_space<vmem>>) attributes {dimension_semantics = [#tpu.dimension_semantics<parallel>], iteration_bounds = array<i64: 2>, scalar_prefetch = 0 : i64, scratch_operands = 0 : i64, tpu.core_type = #tpu.core_type<tc>, window_params = [{transform_indices = @transform_0, window_bounds = array<i64: 8, 16>}, {transform_indices = @transform_1, window_bounds = array<i64: 2, 8, 32>}, {pipeline_mode = #tpu.pipeline_mode<synchronous>, transform_indices = @transform_2, window_bounds = array<i64: 2, 16, 32>}, {pipeline_mode = #tpu.pipeline_mode<synchronous>, transform_indices = @transform_3, window_bounds = array<i64: 2, 32, 32>}, {pipeline_mode = #tpu.pipeline_mode<synchronous>, transform_indices = @transform_4, window_bounds = array<i64: 1, 32, 32>}, {pipeline_mode = #tpu.pipeline_mode<synchronous>, transform_indices = @transform_5, window_bounds = array<i64: 2, 1, 32>}, {pipeline_mode = #tpu.pipeline_mode<synchronous>, transform_indices = @transform_6, window_bounds = array<i64: 2, 32, 16>}, {pipeline_mode = #tpu.pipeline_mode<synchronous>, transform_indices = @transform_7, window_bounds = array<i64: 1, 16>}, {transform_indices = @transform_8, window_bounds = array<i64: 8, 16>}, {transform_indices = @transform_9, window_bounds = array<i64: 2, 8, 32>}]} {
    %c0 = arith.constant 0 : index
    %c0_0 = arith.constant 0 : index
    %0 = vector.load %arg1[%c0, %c0_0] : memref<8x16xf32, #tpu.memory_space<vmem>>, vector<8x16xf32>
    %1 = arith.truncf %0 : vector<8x16xf32> to vector<8x16xbf16>
    %c0_1 = arith.constant 0 : index
    %c0_2 = arith.constant 0 : index
    %c0_3 = arith.constant 0 : index
    %2 = vector.load %arg2[%c0_1, %c0_2, %c0_3] : memref<2x8x32xf32, #tpu.memory_space<vmem>>, vector<1x8x32xf32>
    %3 = vector.shape_cast %2 : vector<1x8x32xf32> to vector<8x32xf32>
    %4 = arith.truncf %3 : vector<8x32xf32> to vector<8x32xbf16>
    %c0_4 = arith.constant 0 : index
    %c0_5 = arith.constant 0 : index
    %c0_6 = arith.constant 0 : index
    %5 = vector.load %arg3[%c0_4, %c0_5, %c0_6] : memref<2x16x32xbf16, #tpu.memory_space<vmem>>, vector<1x16x32xbf16>
    %6 = vector.shape_cast %5 : vector<1x16x32xbf16> to vector<16x32xbf16>
    %cst = arith.constant dense<0.000000e+00> : vector<8x32xf32>
    %7 = tpu.matmul %1, %6, %cst {dimension_numbers = #tpu.dot_dimension_numbers<[1], [0], [0], [1], [0, 0, 1, 1], [], []>} : vector<8x16xbf16>, vector<16x32xbf16>, vector<8x32xf32> -> vector<8x32xf32>
    %c0_7 = arith.constant 0 : index
    %c0_8 = arith.constant 0 : index
    %c0_9 = arith.constant 0 : index
    %8 = vector.load %arg4[%c0_7, %c0_8, %c0_9] : memref<2x32x32xbf16, #tpu.memory_space<vmem>>, vector<1x32x32xbf16>
    %9 = vector.shape_cast %8 : vector<1x32x32xbf16> to vector<32x32xbf16>
    %cst_10 = arith.constant dense<0.000000e+00> : vector<8x32xf32>
    %10 = tpu.matmul %4, %9, %cst_10 {dimension_numbers = #tpu.dot_dimension_numbers<[1], [0], [0], [1], [0, 0, 1, 1], [], []>} : vector<8x32xbf16>, vector<32x32xbf16>, vector<8x32xf32> -> vector<8x32xf32>
    %11 = arith.addf %7, %10 : vector<8x32xf32>
    %c0_11 = arith.constant 0 : index
    %c0_12 = arith.constant 0 : index
    %c0_13 = arith.constant 0 : index
    %12 = vector.load %arg6[%c0_11, %c0_12, %c0_13] : memref<2x1x32xf32, #tpu.memory_space<vmem>>, vector<1x1x32xf32>
    %13 = vector.shape_cast %12 : vector<1x1x32xf32> to vector<1x32xf32>
    %14 = vector.broadcast %13 : vector<1x32xf32> to vector<8x32xf32>
    %15 = arith.addf %11, %14 : vector<8x32xf32>
    %16 = math.tanh %15 : vector<8x32xf32>
    %17 = arith.truncf %16 : vector<8x32xf32> to vector<8x32xbf16>
    %c0_14 = arith.constant 0 : index
    %c0_15 = arith.constant 0 : index
    %c0_16 = arith.constant 0 : index
    %18 = vector.load %arg10[%c0_14, %c0_15, %c0_16] : memref<2x8x32xbf16, #tpu.memory_space<vmem>>, vector<1x8x32xbf16>
    %19 = vector.shape_cast %18 : vector<1x8x32xbf16> to vector<8x32xbf16>
    %20 = vector.shape_cast %17 : vector<8x32xbf16> to vector<1x8x32xbf16>
    tpu.vector_store %arg10[%c0_14, %c0_15, %c0_16], %20 {strides = array<i32>} : memref<2x8x32xbf16, #tpu.memory_space<vmem>>, vector<1x8x32xbf16>,
    %c0_17 = arith.constant 0 : index
    %c0_18 = arith.constant 0 : index
    %c0_19 = arith.constant 0 : index
    %21 = vector.load %arg7[%c0_17, %c0_18, %c0_19] : memref<2x32x16xbf16, #tpu.memory_space<vmem>>, vector<1x32x16xbf16>
    %22 = vector.shape_cast %21 : vector<1x32x16xbf16> to vector<32x16xbf16>
    %cst_20 = arith.constant dense<0.000000e+00> : vector<8x16xf32>
    %23 = tpu.matmul %17, %22, %cst_20 {dimension_numbers = #tpu.dot_dimension_numbers<[1], [0], [0], [1], [0, 0, 1, 1], [], []>} : vector<8x32xbf16>, vector<32x16xbf16>, vector<8x16xf32> -> vector<8x16xf32>
    %c1 = arith.constant 1 : index
    %c0_21 = arith.constant 0 : index
    %c0_22 = arith.constant 0 : index
    %24 = vector.load %arg2[%c1, %c0_21, %c0_22] : memref<2x8x32xf32, #tpu.memory_space<vmem>>, vector<1x8x32xf32>
    %25 = vector.shape_cast %24 : vector<1x8x32xf32> to vector<8x32xf32>
    %26 = arith.truncf %25 : vector<8x32xf32> to vector<8x32xbf16>
    %c1_23 = arith.constant 1 : index
    %c0_24 = arith.constant 0 : index
    %c0_25 = arith.constant 0 : index
    %27 = vector.load %arg3[%c1_23, %c0_24, %c0_25] : memref<2x16x32xbf16, #tpu.memory_space<vmem>>, vector<1x16x32xbf16>
    %28 = vector.shape_cast %27 : vector<1x16x32xbf16> to vector<16x32xbf16>
    %cst_26 = arith.constant dense<0.000000e+00> : vector<8x32xf32>
    %29 = tpu.matmul %1, %28, %cst_26 {dimension_numbers = #tpu.dot_dimension_numbers<[1], [0], [0], [1], [0, 0, 1, 1], [], []>} : vector<8x16xbf16>, vector<16x32xbf16>, vector<8x32xf32> -> vector<8x32xf32>
    %c1_27 = arith.constant 1 : index
    %c0_28 = arith.constant 0 : index
    %c0_29 = arith.constant 0 : index
    %30 = vector.load %arg4[%c1_27, %c0_28, %c0_29] : memref<2x32x32xbf16, #tpu.memory_space<vmem>>, vector<1x32x32xbf16>
    %31 = vector.shape_cast %30 : vector<1x32x32xbf16> to vector<32x32xbf16>
    %cst_30 = arith.constant dense<0.000000e+00> : vector<8x32xf32>
    %32 = tpu.matmul %26, %31, %cst_30 {dimension_numbers = #tpu.dot_dimension_numbers<[1], [0], [0], [1], [0, 0, 1, 1], [], []>} : vector<8x32xbf16>, vector<32x32xbf16>, vector<8x32xf32> -> vector<8x32xf32>
    %33 = arith.addf %29, %32 : vector<8x32xf32>
    %c1_31 = arith.constant 1 : index
    %c0_32 = arith.constant 0 : index
    %c0_33 = arith.constant 0 : index
    %34 = vector.load %arg6[%c1_31, %c0_32, %c0_33] : memref<2x1x32xf32, #tpu.memory_space<vmem>>, vector<1x1x32xf32>
    %35 = vector.shape_cast %34 : vector<1x1x32xf32> to vector<1x32xf32>
    %36 = vector.broadcast %35 : vector<1x32xf32> to vector<8x32xf32>
    %37 = arith.addf %33, %36 : vector<8x32xf32>
    %c0_34 = arith.constant 0 : index
    %c0_35 = arith.constant 0 : index
    %c0_36 = arith.constant 0 : index
    %38 = vector.load %arg5[%c0_34, %c0_35, %c0_36] : memref<1x32x32xbf16, #tpu.memory_space<vmem>>, vector<1x32x32xbf16>
    %39 = vector.shape_cast %38 : vector<1x32x32xbf16> to vector<32x32xbf16>
    %cst_37 = arith.constant dense<0.000000e+00> : vector<8x32xf32>
    %40 = tpu.matmul %17, %39, %cst_37 {dimension_numbers = #tpu.dot_dimension_numbers<[1], [0], [0], [1], [0, 0, 1, 1], [], []>} : vector<8x32xbf16>, vector<32x32xbf16>, vector<8x32xf32> -> vector<8x32xf32>
    %41 = arith.addf %37, %40 : vector<8x32xf32>
    %42 = math.tanh %41 : vector<8x32xf32>
    %43 = arith.truncf %42 : vector<8x32xf32> to vector<8x32xbf16>
    %c1_38 = arith.constant 1 : index
    %c0_39 = arith.constant 0 : index
    %c0_40 = arith.constant 0 : index
    %44 = vector.load %arg10[%c1_38, %c0_39, %c0_40] : memref<2x8x32xbf16, #tpu.memory_space<vmem>>, vector<1x8x32xbf16>
    %45 = vector.shape_cast %44 : vector<1x8x32xbf16> to vector<8x32xbf16>
    %46 = vector.shape_cast %43 : vector<8x32xbf16> to vector<1x8x32xbf16>
    tpu.vector_store %arg10[%c1_38, %c0_39, %c0_40], %46 {strides = array<i32>} : memref<2x8x32xbf16, #tpu.memory_space<vmem>>, vector<1x8x32xbf16>,
    %c1_41 = arith.constant 1 : index
    %c0_42 = arith.constant 0 : index
    %c0_43 = arith.constant 0 : index
    %47 = vector.load %arg7[%c1_41, %c0_42, %c0_43] : memref<2x32x16xbf16, #tpu.memory_space<vmem>>, vector<1x32x16xbf16>
    %48 = vector.shape_cast %47 : vector<1x32x16xbf16> to vector<32x16xbf16>
    %cst_44 = arith.constant dense<0.000000e+00> : vector<8x16xf32>
    %49 = tpu.matmul %43, %48, %cst_44 {dimension_numbers = #tpu.dot_dimension_numbers<[1], [0], [0], [1], [0, 0, 1, 1], [], []>} : vector<8x32xbf16>, vector<32x16xbf16>, vector<8x16xf32> -> vector<8x16xf32>
    %50 = arith.addf %23, %49 : vector<8x16xf32>
    %c0_45 = arith.constant 0 : index
    %c0_46 = arith.constant 0 : index
    %51 = vector.load %arg8[%c0_45, %c0_46] : memref<1x16xf32, #tpu.memory_space<vmem>>, vector<1x16xf32>
    %52 = vector.broadcast %51 : vector<1x16xf32> to vector<8x16xf32>
    %53 = arith.addf %50, %52 : vector<8x16xf32>
    %54 = arith.truncf %53 : vector<8x16xf32> to vector<8x16xbf16>
    %c0_47 = arith.constant 0 : index
    %c0_48 = arith.constant 0 : index
    %55 = vector.load %arg9[%c0_47, %c0_48] : memref<8x16xbf16, #tpu.memory_space<vmem>>, vector<8x16xbf16>
    tpu.vector_store %arg9[%c0_47, %c0_48], %54 {strides = array<i32>} : memref<8x16xbf16, #tpu.memory_space<vmem>>, vector<8x16xbf16>,
    return
  }
  func.func @transform_0(%arg0: i32) -> (i32, i32) {
    %c0_i32 = arith.constant 0 : i32
    %c0_i32_0 = arith.constant 0 : i32
    return %arg0, %c0_i32 : i32, i32
  }
  func.func @transform_1(%arg0: i32) -> (i32, i32, i32) {
    %c0_i32 = arith.constant 0 : i32
    %c0_i32_0 = arith.constant 0 : i32
    %c0_i32_1 = arith.constant 0 : i32
    return %c0_i32, %arg0, %c0_i32_0 : i32, i32, i32
  }
  func.func @transform_2(%arg0: i32) -> (i32, i32, i32) {
    %c0_i32 = arith.constant 0 : i32
    %c0_i32_0 = arith.constant 0 : i32
    %c0_i32_1 = arith.constant 0 : i32
    %c0_i32_2 = arith.constant 0 : i32
    return %c0_i32, %c0_i32_0, %c0_i32_1 : i32, i32, i32
  }
  func.func @transform_3(%arg0: i32) -> (i32, i32, i32) {
    %c0_i32 = arith.constant 0 : i32
    %c0_i32_0 = arith.constant 0 : i32
    %c0_i32_1 = arith.constant 0 : i32
    %c0_i32_2 = arith.constant 0 : i32
    return %c0_i32, %c0_i32_0, %c0_i32_1 : i32, i32, i32
  }
  func.func @transform_4(%arg0: i32) -> (i32, i32, i32) {
    %c0_i32 = arith.constant 0 : i32
    %c0_i32_0 = arith.constant 0 : i32
    %c0_i32_1 = arith.constant 0 : i32
    %c0_i32_2 = arith.constant 0 : i32
    return %c0_i32, %c0_i32_0, %c0_i32_1 : i32, i32, i32
  }
  func.func @transform_5(%arg0: i32) -> (i32, i32, i32) {
    %c0_i32 = arith.constant 0 : i32
    %c0_i32_0 = arith.constant 0 : i32
    %c0_i32_1 = arith.constant 0 : i32
    %c0_i32_2 = arith.constant 0 : i32
    return %c0_i32, %c0_i32_0, %c0_i32_1 : i32, i32, i32
  }
  func.func @transform_6(%arg0: i32) -> (i32, i32, i32) {
    %c0_i32 = arith.constant 0 : i32
    %c0_i32_0 = arith.constant 0 : i32
    %c0_i32_1 = arith.constant 0 : i32
    %c0_i32_2 = arith.constant 0 : i32
    return %c0_i32, %c0_i32_0, %c0_i32_1 : i32, i32, i32
  }
  func.func @transform_7(%arg0: i32) -> (i32, i32) {
    %c0_i32 = arith.constant 0 : i32
    %c0_i32_0 = arith.constant 0 : i32
    %c0_i32_1 = arith.constant 0 : i32
    return %c0_i32, %c0_i32_0 : i32, i32
  }
  func.func @transform_8(%arg0: i32) -> (i32, i32) {
    %c0_i32 = arith.constant 0 : i32
    %c0_i32_0 = arith.constant 0 : i32
    return %arg0, %c0_i32 : i32, i32
  }
  func.func @transform_9(%arg0: i32) -> (i32, i32, i32) {
    %c0_i32 = arith.constant 0 : i32
    %c0_i32_0 = arith.constant 0 : i32
    %c0_i32_1 = arith.constant 0 : i32
    return %c0_i32, %arg0, %c0_i32_0 : i32, i32, i32
  }
}

</mosaic_0001>

<llo_original>
// kernel: rnn_forward.1
$region0: #{rnn_forward.1}
  #allocation0 [shape = 'u32[]', space=smem, size = 0x4, offset = 0x4, fixed_abs, tag = 'smem constant byte address 0x4 - core index']
  #allocation1 [shape = 'u32[144,128]{1,0:T(1,128)}', space=vmem, size = 0x12000, scoped, tag = 'internal scratch']
  %s0 = inlined_call_operand.hbm [shape: f32[16,16], index: 0, kind: input, shape index: {}]
  %s1 = inlined_call_operand.vmem [shape: f32[2,16,32], index: 1, kind: input, shape index: {}]
  %s2 = inlined_call_operand.hbm [shape: bf16[2,16,32], index: 2, kind: input, shape index: {}]
  %s3 = inlined_call_operand.vmem [shape: bf16[2,32,32], index: 3, kind: input, shape index: {}]
  %s4 = inlined_call_operand.hbm [shape: bf16[1,32,32], index: 4, kind: input, shape index: {}]
  %s5 = inlined_call_operand.vmem [shape: f32[2,1,32], index: 5, kind: input, shape index: {}]
  %s6 = inlined_call_operand.vmem [shape: bf16[2,32,16], index: 6, kind: input, shape index: {}]
  %s7 = inlined_call_operand.vmem [shape: f32[1,16], index: 7, kind: input, shape index: {}]
  %s8 = inlined_call_operand.hbm [shape: bf16[16,16], index: 8, kind: output, shape index: {0}]
  %s9 = inlined_call_operand.hbm [shape: bf16[2,16,32], index: 9, kind: output, shape index: {1}]
  %10 = xla_tuple %s8, %s9
  %s11 = sld [smem:[#allocation0]]
  $region123: #{rnn_forward.1} parent=0
    _
  %s13 = ssub.s32 1, %s11
  %s14 = scalar_select 0, %s13, %s11
  $region1: #{rnn_forward.1} parent=0
    #allocation2 [shape = 'u8[8192]{0}', space=vmem, size = 0x2000, scoped, tag = 'input window, operand 0']
    #allocation3 [shape = 's32[2]{0}', space=sflag, size = 0x8, scoped, tag = 'scoped memory for rnn_forward.1']
    #allocation4 [shape = 's32[2]{0}', space=sflag, size = 0x8, scoped, tag = 'scoped memory for rnn_forward.1']
    #allocation5 [shape = 'u8[16384]{0}', space=vmem, size = 0x4000, scoped, tag = 'input window, operand 1']
    #allocation6 [shape = 'u8[8192]{0}', space=vmem, size = 0x2000, scoped, tag = 'input window, operand 2, single buffered']
    #allocation7 [shape = 's32[1]{0}', space=sflag, size = 0x4, scoped, tag = 'scoped memory for rnn_forward.1']
    #allocation8 [shape = 'u8[8192]{0}', space=vmem, size = 0x2000, scoped, tag = 'input window, operand 4, single buffered']
    #allocation9 [shape = 'u8[4096]{0}', space=vmem, size = 0x1000, scoped, tag = 'output window, operand 0']
    #allocation10 [shape = 'u8[8192]{0}', space=vmem, size = 0x2000, scoped, tag = 'output window, operand 1']
    #allocation11 [shape = 's32[2]{0}', space=sflag, size = 0x8, scoped, tag = 'scoped memory for rnn_forward.1']
    %15 = vsyncpa [#allocation3], 0
    %s16 = scalar_lea.sflag [#allocation3], 1
    %17 = vsyncpa %s16, 0
    %18 = vsyncpa [#allocation7], 0
    %19 = vsyncpa [#allocation4], 0
    %s20 = scalar_lea.sflag [#allocation4], 1
    %21 = vsyncpa %s20, 0
    %22 = vsyncpa [#allocation11], 0
    %s23 = scalar_lea.sflag [#allocation11], 1
    %24 = vsyncpa %s23, 0
    loop: start=0, step=1, limit=4
    $region2: #{rnn_forward.1} parent=1 // loop_pre_header
      _
    $region3: #{rnn_forward.1} parent=1 // loop_header
      %s26 = sphi 0, %s30
      %p27 = scmp.ge.s32.totalorder %s26, 4
      %s36 = sphi 0, %s38
      %s39 = sphi 0, %s36
      %s40 = sphi 0, %s39
      %s56 = sphi 0, %s40
      %s62 = sphi 0, %s64
      %s65 = sphi 0, %s62
      %s66 = sphi 0, %s65
      %s82 = sphi 0, %s66
      %s86 = sphi 0, %s86
      %s88 = sphi 0, %s86
      %s89 = sphi 0, %s88
      %s103 = sphi 0, %s89
      %s107 = sphi 0, %s107
      %s109 = sphi 0, %s107
      %s110 = sphi 0, %s109
      %s124 = sphi 0, %s110
      %s128 = sphi 0, %s128
      %s130 = sphi 0, %s128
      %s131 = sphi 0, %s130
      %s145 = sphi 0, %s131
      %s149 = sphi 0, %s149
      %s151 = sphi 0, %s149
      %s152 = sphi 0, %s151
      %s166 = sphi 0, %s152
      %s170 = sphi 0, %s170
      %s172 = sphi 0, %s170
      %s173 = sphi 0, %s172
      %s187 = sphi 0, %s173
      %s191 = sphi 0, %s191
      %s193 = sphi 0, %s191
      %s194 = sphi 0, %s193
      %s208 = sphi 0, %s194
      %s214 = sphi 0, %s216
      %s217 = sphi 0, %s214
      %s218 = sphi 0, %s217
      %s234 = sphi 0, %s218
      %s240 = sphi 0, %s242
      %s243 = sphi 0, %s240
      %s244 = sphi 0, %s243
      %s260 = sphi 0, %s244
    $region4: #{rnn_forward.1} parent=1 // loop_header_branch
      %29 = sbr.rel (%p27) target = $region8
    $region5: #{rnn_forward.1} parent=1 // loop_body
      %s31 = ssub.s32 %s26, 1
      %s32 = ssub.s32 %s26, 2
      %s33 = sadd.s32 %s26, 1
      %s34 = ssub.s32 %s26, %s33
      %p35 = scmp.eq.s32.totalorder %s34, 0
      %s37 = sadd.s32 %s36, 1
      %s38 = scalar_select %p35, %s36, %s37
      %p41 = pneg %p35
      %p42 = scmp.eq.s32.totalorder %s26, 1
      %p43 = por %p41, %p42
      %p44 = scmp.ne.s32.totalorder %s36, %s39
      %p45 = scmp.eq.s32.totalorder %s26, 0
      %p46 = por %p44, %p45
      %p47 = scmp.ne.s32.totalorder %s36, %s39
      %p48 = scmp.eq.s32.totalorder %s31, 1
      %p49 = por %p47, %p48
      %p50 = scmp.ne.s32.totalorder %s39, %s40
      %p51 = scmp.eq.s32.totalorder %s31, 0
      %p52 = por %p50, %p51
      %p53 = scmp.ne.s32.totalorder %s39, %s40
      %p54 = scmp.eq.s32.totalorder %s32, 1
      %p55 = por %p53, %p54
      %p57 = scmp.ne.s32.totalorder %s40, %s56
      %p58 = scmp.eq.s32.totalorder %s32, 0
      %p59 = por %p57, %p58
      %s60 = ssub.s32 %s26, %s33
      %p61 = scmp.eq.s32.totalorder %s60, 0
      %s63 = sadd.s32 %s62, 1
      %s64 = scalar_select %p61, %s62, %s63
      %p67 = pneg %p61
      %p68 = scmp.eq.s32.totalorder %s26, 1
      %p69 = por %p67, %p68
      %p70 = scmp.ne.s32.totalorder %s62, %s65
      %p71 = scmp.eq.s32.totalorder %s26, 0
      %p72 = por %p70, %p71
      %p73 = scmp.ne.s32.totalorder %s62, %s65
      %p74 = scmp.eq.s32.totalorder %s31, 1
      %p75 = por %p73, %p74
      %p76 = scmp.ne.s32.totalorder %s65, %s66
      %p77 = scmp.eq.s32.totalorder %s31, 0
      %p78 = por %p76, %p77
      %p79 = scmp.ne.s32.totalorder %s65, %s66
      %p80 = scmp.eq.s32.totalorder %s32, 1
      %p81 = por %p79, %p80
      %p83 = scmp.ne.s32.totalorder %s66, %s82
      %p84 = scmp.eq.s32.totalorder %s32, 0
      %p85 = por %p83, %p84
      %s87 = sadd.s32 %s86, 1
      %p90 = scmp.eq.s32.totalorder %s26, 1
      %p91 = scmp.ne.s32.totalorder %s86, %s88
      %p92 = scmp.eq.s32.totalorder %s26, 0
      %p93 = por %p91, %p92
      %p94 = scmp.ne.s32.totalorder %s86, %s88
      %p95 = scmp.eq.s32.totalorder %s31, 1
      %p96 = por %p94, %p95
      %p97 = scmp.ne.s32.totalorder %s88, %s89
      %p98 = scmp.eq.s32.totalorder %s31, 0
      %p99 = por %p97, %p98
      %p100 = scmp.ne.s32.totalorder %s88, %s89
      %p101 = scmp.eq.s32.totalorder %s32, 1
      %p102 = por %p100, %p101
      %p104 = scmp.ne.s32.totalorder %s89, %s103
      %p105 = scmp.eq.s32.totalorder %s32, 0
      %p106 = por %p104, %p105
      %s108 = sadd.s32 %s107, 1
      %p111 = scmp.eq.s32.totalorder %s26, 1
      %p112 = scmp.ne.s32.totalorder %s107, %s109
      %p113 = scmp.eq.s32.totalorder %s26, 0
      %p114 = por %p112, %p113
      %p115 = scmp.ne.s32.totalorder %s107, %s109
      %p116 = scmp.eq.s32.totalorder %s31, 1
      %p117 = por %p115, %p116
      %p118 = scmp.ne.s32.totalorder %s109, %s110
      %p119 = scmp.eq.s32.totalorder %s31, 0
      %p120 = por %p118, %p119
      %p121 = scmp.ne.s32.totalorder %s109, %s110
      %p122 = scmp.eq.s32.totalorder %s32, 1
      %p123 = por %p121, %p122
      %p125 = scmp.ne.s32.totalorder %s110, %s124
      %p126 = scmp.eq.s32.totalorder %s32, 0
      %p127 = por %p125, %p126
      %s129 = sadd.s32 %s128, 1
      %p132 = scmp.eq.s32.totalorder %s26, 1
      %p133 = scmp.ne.s32.totalorder %s128, %s130
      %p134 = scmp.eq.s32.totalorder %s26, 0
      %p135 = por %p133, %p134
      %p136 = scmp.ne.s32.totalorder %s128, %s130
      %p137 = scmp.eq.s32.totalorder %s31, 1
      %p138 = por %p136, %p137
      %p139 = scmp.ne.s32.totalorder %s130, %s131
      %p140 = scmp.eq.s32.totalorder %s31, 0
      %p141 = por %p139, %p140
      %p142 = scmp.ne.s32.totalorder %s130, %s131
      %p143 = scmp.eq.s32.totalorder %s32, 1
      %p144 = por %p142, %p143
      %p146 = scmp.ne.s32.totalorder %s131, %s145
      %p147 = scmp.eq.s32.totalorder %s32, 0
      %p148 = por %p146, %p147
      %s150 = sadd.s32 %s149, 1
      %p153 = scmp.eq.s32.totalorder %s26, 1
      %p154 = scmp.ne.s32.totalorder %s149, %s151
      %p155 = scmp.eq.s32.totalorder %s26, 0
      %p156 = por %p154, %p155
      %p157 = scmp.ne.s32.totalorder %s149, %s151
      %p158 = scmp.eq.s32.totalorder %s31, 1
      %p159 = por %p157, %p158
      %p160 = scmp.ne.s32.totalorder %s151, %s152
      %p161 = scmp.eq.s32.totalorder %s31, 0
      %p162 = por %p160, %p161
      %p163 = scmp.ne.s32.totalorder %s151, %s152
      %p164 = scmp.eq.s32.totalorder %s32, 1
      %p165 = por %p163, %p164
      %p167 = scmp.ne.s32.totalorder %s152, %s166
      %p168 = scmp.eq.s32.totalorder %s32, 0
      %p169 = por %p167, %p168
      %s171 = sadd.s32 %s170, 1
      %p174 = scmp.eq.s32.totalorder %s26, 1
      %p175 = scmp.ne.s32.totalorder %s170, %s172
      %p176 = scmp.eq.s32.totalorder %s26, 0
      %p177 = por %p175, %p176
      %p178 = scmp.ne.s32.totalorder %s170, %s172
      %p179 = scmp.eq.s32.totalorder %s31, 1
      %p180 = por %p178, %p179
      %p181 = scmp.ne.s32.totalorder %s172, %s173
      %p182 = scmp.eq.s32.totalorder %s31, 0
      %p183 = por %p181, %p182
      %p184 = scmp.ne.s32.totalorder %s172, %s173
      %p185 = scmp.eq.s32.totalorder %s32, 1
      %p186 = por %p184, %p185
      %p188 = scmp.ne.s32.totalorder %s173, %s187
      %p189 = scmp.eq.s32.totalorder %s32, 0
      %p190 = por %p188, %p189
      %s192 = sadd.s32 %s191, 1
      %p195 = scmp.eq.s32.totalorder %s26, 1
      %p196 = scmp.ne.s32.totalorder %s191, %s193
      %p197 = scmp.eq.s32.totalorder %s26, 0
      %p198 = por %p196, %p197
      %p199 = scmp.ne.s32.totalorder %s191, %s193
      %p200 = scmp.eq.s32.totalorder %s31, 1
      %p201 = por %p199, %p200
      %p202 = scmp.ne.s32.totalorder %s193, %s194
      %p203 = scmp.eq.s32.totalorder %s31, 0
      %p204 = por %p202, %p203
      %p205 = scmp.ne.s32.totalorder %s193, %s194
      %p206 = scmp.eq.s32.totalorder %s32, 1
      %p207 = por %p205, %p206
      %p209 = scmp.ne.s32.totalorder %s194, %s208
      %p210 = scmp.eq.s32.totalorder %s32, 0
      %p211 = por %p209, %p210
      %s212 = ssub.s32 %s26, %s33
      %p213 = scmp.eq.s32.totalorder %s212, 0
      %s215 = sadd.s32 %s214, 1
      %s216 = scalar_select %p213, %s214, %s215
      %p219 = pneg %p213
      %p220 = scmp.eq.s32.totalorder %s26, 1
      %p221 = por %p219, %p220
      %p222 = scmp.ne.s32.totalorder %s214, %s217
      %p223 = scmp.eq.s32.totalorder %s26, 0
      %p224 = por %p222, %p223
      %p225 = scmp.ne.s32.totalorder %s214, %s217
      %p226 = scmp.eq.s32.totalorder %s31, 1
      %p227 = por %p225, %p226
      %p228 = scmp.ne.s32.totalorder %s217, %s218
      %p229 = scmp.eq.s32.totalorder %s31, 0
      %p230 = por %p228, %p229
      %p231 = scmp.ne.s32.totalorder %s217, %s218
      %p232 = scmp.eq.s32.totalorder %s32, 1
      %p233 = por %p231, %p232
      %p235 = scmp.ne.s32.totalorder %s218, %s234
      %p236 = scmp.eq.s32.totalorder %s32, 0
      %p237 = por %p235, %p236
      %s238 = ssub.s32 %s26, %s33
      %p239 = scmp.eq.s32.totalorder %s238, 0
      %s241 = sadd.s32 %s240, 1
      %s242 = scalar_select %p239, %s240, %s241
      %p245 = pneg %p239
      %p246 = scmp.eq.s32.totalorder %s26, 1
      %p247 = por %p245, %p246
      %p248 = scmp.ne.s32.totalorder %s240, %s243
      %p249 = scmp.eq.s32.totalorder %s26, 0
      %p250 = por %p248, %p249
      %p251 = scmp.ne.s32.totalorder %s240, %s243
      %p252 = scmp.eq.s32.totalorder %s31, 1
      %p253 = por %p251, %p252
      %p254 = scmp.ne.s32.totalorder %s243, %s244
      %p255 = scmp.eq.s32.totalorder %s31, 0
      %p256 = por %p254, %p255
      %p257 = scmp.ne.s32.totalorder %s243, %s244
      %p258 = scmp.eq.s32.totalorder %s32, 1
      %p259 = por %p257, %p258
      %p261 = scmp.ne.s32.totalorder %s244, %s260
      %p262 = scmp.eq.s32.totalorder %s32, 0
      %p263 = por %p261, %p262
      %p264 = scmp.le.s32.totalorder 1, %s26
      %p265 = scmp.lt.s32.totalorder %s26, 3
      %p266 = pnand %p264, %p265
      %p267 = pneg %p266
      // Predicated region
      $region9: #{rnn_forward.1} parent=5 // pred_check
        _
      $region10: #{rnn_forward.1} parent=5 // pred_check_branch
        %269 = sbr.rel (%p266) target = $region12
      $region11: #{rnn_forward.1} parent=5 // pred_region
        %s270 = ssub.s32 %s26, 1
        // Predicated region
        $region13: #{rnn_forward.1} parent=11 // pred_check
          %p271 = pneg %p99
        $region14: #{rnn_forward.1} parent=11 // pred_check_branch
          %273 = sbr.rel (%p271) target = $region16
        $region15: #{rnn_forward.1} parent=11 // pred_region
          %s275 = ssub.s32 256, 256
          %276 = vsyncadd [#allocation7], %s275
          %s277 = sshll.u32 [#allocation6], 4
          %s278 = int_to_ptr.vmem [resolvable:$true] %s277
          %283 = dma.hbm_to_vmem [thread:$0]  %s2, 256, %s278, [#allocation7], 64, 64, 4
        $region16: #{rnn_forward.1} parent=11 // pred_fallthru
          _
        // Predicated region
        $region17: #{rnn_forward.1} parent=11 // pred_check
          %p284 = pneg %p120
        $region18: #{rnn_forward.1} parent=11 // pred_check_branch
          %286 = sbr.rel (%p284) target = $region20
        $region19: #{rnn_forward.1} parent=11 // pred_region
          _
        $region20: #{rnn_forward.1} parent=11 // pred_fallthru
          _
        // Predicated region
        $region21: #{rnn_forward.1} parent=11 // pred_check
          %p287 = pneg %p141
        $region22: #{rnn_forward.1} parent=11 // pred_check_branch
          %289 = sbr.rel (%p287) target = $region24
        $region23: #{rnn_forward.1} parent=11 // pred_region
          %s291 = ssub.s32 256, 256
          %292 = vsyncadd [#allocation7], %s291
          %s293 = sshll.u32 [#allocation8], 4
          %s294 = int_to_ptr.vmem [resolvable:$true] %s293
          %299 = dma.hbm_to_vmem [thread:$0]  %s4, 256, %s294, [#allocation7], 64, 64, 4
        $region24: #{rnn_forward.1} parent=11 // pred_fallthru
          _
        // Predicated region
        $region25: #{rnn_forward.1} parent=11 // pred_check
          %p300 = pneg %p162
        $region26: #{rnn_forward.1} parent=11 // pred_check_branch
          %302 = sbr.rel (%p300) target = $region28
        $region27: #{rnn_forward.1} parent=11 // pred_region
          _
        $region28: #{rnn_forward.1} parent=11 // pred_fallthru
          _
        // Predicated region
        $region29: #{rnn_forward.1} parent=11 // pred_check
          %p303 = pneg %p183
        $region30: #{rnn_forward.1} parent=11 // pred_check_branch
          %305 = sbr.rel (%p303) target = $region32
        $region31: #{rnn_forward.1} parent=11 // pred_region
          _
        $region32: #{rnn_forward.1} parent=11 // pred_fallthru
          _
        // Predicated region
        $region33: #{rnn_forward.1} parent=11 // pred_check
          %p306 = pneg %p204
        $region34: #{rnn_forward.1} parent=11 // pred_check_branch
          %308 = sbr.rel (%p306) target = $region36
        $region35: #{rnn_forward.1} parent=11 // pred_region
          _
        $region36: #{rnn_forward.1} parent=11 // pred_fallthru
          _
      $region12: #{rnn_forward.1} parent=5 // pred_fallthru
        _
      %p309 = scmp.lt.s32.totalorder %s26, 2
      // Predicated region
      $region37: #{rnn_forward.1} parent=5 // pred_check
        %p310 = pneg %p309
      $region38: #{rnn_forward.1} parent=5 // pred_check_branch
        %312 = sbr.rel (%p310) target = $region40
      $region39: #{rnn_forward.1} parent=5 // pred_region
        // Predicated region
        $region41: #{rnn_forward.1} parent=39 // pred_check
          %p313 = pneg %p46
        $region42: #{rnn_forward.1} parent=39 // pred_check_branch
          %315 = sbr.rel (%p313) target = $region44
        $region43: #{rnn_forward.1} parent=39 // pred_region
          %s316 = sand.u32 %s36, 1
          %s317 = scalar_lea.sflag [#allocation3], %s316
          %s318 = sand.u32 %s36, 1
          %s319 = smul.addr %s318, 8
          %s320 = scalar_lea.vmem [#allocation2], %s319
          %s322 = ssub.s32 128, 128
          %323 = vsyncadd %s317, %s322
          %s324 = smul.addr %s26, 128
          %s325 = scalar_lea.hbm %s0, %s324
          %s327 = sshll.u32 %s320, 4
          %s328 = int_to_ptr.vmem [resolvable:$true] %s327
          %330 = dma.hbm_to_vmem [thread:$0]  %s325, 128, %s328, %s317
        $region44: #{rnn_forward.1} parent=39 // pred_fallthru
          _
        // Predicated region
        $region45: #{rnn_forward.1} parent=39 // pred_check
          %p331 = pneg %p72
        $region46: #{rnn_forward.1} parent=39 // pred_check_branch
          %333 = sbr.rel (%p331) target = $region48
        $region47: #{rnn_forward.1} parent=39 // pred_region
          %s334 = sand.u32 %s62, 1
          %s335 = sand.u32 %s62, 1
          %s336 = smul.addr %s335, 16
          %s337 = scalar_lea.vmem [#allocation5], %s336
          %s338 = smul.addr %s26, 8
          %s339 = scalar_lea.vmem %s1, %s338
          // Predicated region
          $region49: #{rnn_forward.1} parent=47 // pred_check
            _
          $region50: #{rnn_forward.1} parent=47 // pred_check_branch
            %341 = sbr.rel (0) target = $region52
          $region51: #{rnn_forward.1} parent=47 // pred_region
            // Predicated region
            $region53: #{rnn_forward.1} parent=51 // pred_check
              _
            $region54: #{rnn_forward.1} parent=51 // pred_check_branch
              %343 = sbr.rel (0) target = $region56
            $region55: #{rnn_forward.1} parent=51 // pred_region
              // Predicated region
              $region68: #{rnn_forward.1} parent=55 // pred_check
                _
              $region69: #{rnn_forward.1} parent=55 // pred_check_branch
                %360 = sbr.rel (0) target = $region71
              $region70: #{rnn_forward.1} parent=55 // pred_region
                loop: start=0, step=1, limit=1
                $region72: #{rnn_forward.1} parent=70 // loop_pre_header
                  _
                $region73: #{rnn_forward.1} parent=70 // loop_header
                  %s362 = sphi 0, %s366
                  %p363 = scmp.ge.s32.totalorder %s362, 1
                  %s367 = sphi %s339, %s339
                  %s368 = sphi %s337, %s337
                $region74: #{rnn_forward.1} parent=70 // loop_header_branch
                  %365 = sbr.rel (%p363) target = $region78
                $region75: #{rnn_forward.1} parent=70 // loop_body
                  %v369 = vld [vmem:[%s367] sm:$0xff]
                  %370 = vst [vmem:[%s368] sm:$0xff] %v369
                  %v371 = vld [vmem:[%s367 + $0x10] sm:$0xff]
                  %372 = vst [vmem:[%s368 + $0x8] sm:$0xff] %v371
                $region76: #{rnn_forward.1} parent=70 // loop_footer
                  %s366 = sadd.s32 1, %s362
                $region77: #{rnn_forward.1} parent=70 // loop_footer_branch
                  %361 = sbr.rel target = $region73
                $region78: #{rnn_forward.1} parent=70 // loop_exit
                  _
              $region71: #{rnn_forward.1} parent=55 // pred_fallthru
                _
              // Predicated region
              $region79: #{rnn_forward.1} parent=55 // pred_check
                _
              $region80: #{rnn_forward.1} parent=55 // pred_check_branch
                %374 = sbr.rel target = $region82
              $region81: #{rnn_forward.1} parent=55 // pred_region
                _
              $region82: #{rnn_forward.1} parent=55 // pred_fallthru
                _
            $region56: #{rnn_forward.1} parent=51 // pred_fallthru
              _
            // Predicated region
            $region57: #{rnn_forward.1} parent=51 // pred_check
              _
            $region58: #{rnn_forward.1} parent=51 // pred_check_branch
              %345 = sbr.rel target = $region60
            $region59: #{rnn_forward.1} parent=51 // pred_region
              loop: start=0, step=1, limit=1
              $region61: #{rnn_forward.1} parent=59 // loop_pre_header
                _
              $region62: #{rnn_forward.1} parent=59 // loop_header
                %s348 = sphi 0, %s352
                %p349 = scmp.ge.s32.totalorder %s348, 1
                %s353 = sphi %s339, %s339
                %s354 = sphi %s337, %s337
              $region63: #{rnn_forward.1} parent=59 // loop_header_branch
                %351 = sbr.rel (%p349) target = $region67
              $region64: #{rnn_forward.1} parent=59 // loop_body
                %v355 = vld [vmem:[%s353] sm:$0xff]
                %356 = vst [vmem:[%s354] sm:$0xff] %v355
                %v357 = vld [vmem:[%s353 + $0x10] sm:$0xff]
                %358 = vst [vmem:[%s354 + $0x8] sm:$0xff] %v357
              $region65: #{rnn_forward.1} parent=59 // loop_footer
                %s352 = sadd.s32 1, %s348
              $region66: #{rnn_forward.1} parent=59 // loop_footer_branch
                %347 = sbr.rel target = $region62
              $region67: #{rnn_forward.1} parent=59 // loop_exit
                _
            $region60: #{rnn_forward.1} parent=51 // pred_fallthru
              _
          $region52: #{rnn_forward.1} parent=47 // pred_fallthru
            _
          %375 = vnop
        $region48: #{rnn_forward.1} parent=39 // pred_fallthru
          _
      $region40: #{rnn_forward.1} parent=5 // pred_fallthru
        _
      %p376 = scmp.le.s32.totalorder 1, %s26
      %p377 = scmp.lt.s32.totalorder %s26, 3
      %p378 = pnand %p376, %p377
      %p379 = pneg %p378
      // Predicated region
      $region83: #{rnn_forward.1} parent=5 // pred_check
        _
      $region84: #{rnn_forward.1} parent=5 // pred_check_branch
        %381 = sbr.rel (%p378) target = $region86
      $region85: #{rnn_forward.1} parent=5 // pred_region
        %s382 = ssub.s32 %s26, 1
        %s383 = sand.u32 %s39, 1
        %s384 = scalar_lea.sflag [#allocation3], %s383
        %s385 = sand.u32 %s39, 1
        %s386 = smul.addr %s385, 8
        %s387 = scalar_lea.vmem [#allocation2], %s386
        // Predicated region
        $region87: #{rnn_forward.1} parent=85 // pred_check
          %p388 = pneg %p52
        $region88: #{rnn_forward.1} parent=85 // pred_check_branch
          %390 = sbr.rel (%p388) target = $region90
        $region89: #{rnn_forward.1} parent=85 // pred_region
          %391 = dma.done %s384, 128
        $region90: #{rnn_forward.1} parent=85 // pred_fallthru
          _
        %s392 = sand.u32 %s65, 1
        %s393 = sand.u32 %s65, 1
        %s394 = smul.addr %s393, 16
        %s395 = scalar_lea.vmem [#allocation5], %s394
        // Predicated region
        $region91: #{rnn_forward.1} parent=85 // pred_check
          %p396 = pneg %p78
        $region92: #{rnn_forward.1} parent=85 // pred_check_branch
          %398 = sbr.rel (%p396) target = $region94
        $region93: #{rnn_forward.1} parent=85 // pred_region
          _
        $region94: #{rnn_forward.1} parent=85 // pred_fallthru
          _
        // Predicated region
        $region95: #{rnn_forward.1} parent=85 // pred_check
          %p399 = pneg %p99
        $region96: #{rnn_forward.1} parent=85 // pred_check_branch
          %401 = sbr.rel (%p399) target = $region98
        $region97: #{rnn_forward.1} parent=85 // pred_region
          %402 = dma.done [#allocation7], 256
        $region98: #{rnn_forward.1} parent=85 // pred_fallthru
          _
        // Predicated region
        $region99: #{rnn_forward.1} parent=85 // pred_check
          %p403 = pneg %p141
        $region100: #{rnn_forward.1} parent=85 // pred_check_branch
          %405 = sbr.rel (%p403) target = $region102
        $region101: #{rnn_forward.1} parent=85 // pred_region
          %406 = dma.done [#allocation7], 256
        $region102: #{rnn_forward.1} parent=85 // pred_fallthru
          _
        %s407 = sand.u32 %s39, 1
        %s408 = scalar_lea.sflag [#allocation3], %s407
        %s409 = sand.u32 %s39, 1
        %s410 = smul.addr %s409, 8
        %s411 = scalar_lea.vmem [#allocation2], %s410
        %p412 = pneg %p52
        %p413 = pneg %p49
        %s414 = sand.u32 %s65, 1
        %s415 = sand.u32 %s65, 1
        %s416 = smul.addr %s415, 16
        %s417 = scalar_lea.vmem [#allocation5], %s416
        %p418 = pneg %p78
        %p419 = pneg %p75
        %p420 = pneg %p99
        %p421 = pneg %p96
        %p422 = pneg %p120
        %p423 = pneg %p117
        %p424 = pneg %p141
        %p425 = pneg %p138
        %p426 = pneg %p162
        %p427 = pneg %p159
        %p428 = pneg %p183
        %p429 = pneg %p180
        %p430 = pneg %p204
        %p431 = pneg %p201
        %p432 = pneg %p230
        %p433 = pneg %p227
        %s434 = sand.u32 %s217, 1
        %s435 = scalar_lea.sflag [#allocation4], %s434
        %s436 = sand.u32 %s217, 1
        %s437 = smul.addr %s436, 4
        %s438 = scalar_lea.vmem [#allocation9], %s437
        %p439 = pneg %p256
        %p440 = pneg %p253
        %s441 = sand.u32 %s243, 1
        %s442 = scalar_lea.sflag [#allocation11], %s441
        %s443 = sand.u32 %s243, 1
        %s444 = smul.addr %s443, 8
        %s445 = scalar_lea.vmem [#allocation10], %s444
        %v447 = vld [vmem:[%s387] sm:$0xff]
        %v448 = vpack.c.bf16 %v447, %v447
        %v449 = vld [vmem:[%s395] sm:$0xff]
        %v450 = vpack.c.bf16 %v449, %v449
        %v451 = vld [vmem:[#allocation6] sm:$0xf]
        %v452 = vld [vmem:[#allocation6 + $0x4] sm:$0xf]
        %v453 = vld [vmem:[%s3] sm:$0xf]
        %v454 = vld [vmem:[%s3 + $0x4] sm:$0xf]
        %v455 = vld [vmem:[%s3 + $0x8] sm:$0xf]
        %v456 = vld [vmem:[%s3 + $0xc] sm:$0xf]
        %v461 = vunpack.c.l.b16 %v453
        %v462 = vunpack.c.l.b16 %v454
        %v463 = vunpack.c.l.b16 %v455
        %v464 = vunpack.c.l.b16 %v456
        %v465 = vpack.c.b16 %v462, %v461
        %v466 = vpack.c.b16 %v464, %v463
        %vm469 = vcmask 261120
        %v471 = vsel %vm469, %v450, 0
        %473 = vmatprep.subr.bf16.mxu0 0
        %474 = vmatpush1.bf16.msra.mxu0 %v465
        %475 = vmatprep.subr.bf16.mxu0 0
        %476 = vmatpush1.bf16.msra.mxu0 %v466
        %477 = vmatprep.subr.bf16.mxu0 0
        %478 = vmatpush1.bf16.msra.mxu0 0
        %479 = vmatprep.subr.bf16.mxu0 0
        %480 = vmatpush1.bf16.msra.mxu0 0
        %481 = vmatprep.subr.bf16.mxu0 0
        %482 = vmatpush1.bf16.msra.mxu0 0
        %483 = vmatprep.subr.bf16.mxu0 0
        %484 = vmatpush1.bf16.msra.mxu0 0
        %485 = vmatprep.subr.bf16.mxu0 0
        %486 = vmatpush1.bf16.msra.mxu0 0
        %487 = vmatprep.subr.bf16.mxu0 0
        %488 = vmatpush1.bf16.msra.mxu0 0
        %489 = vmatprep.subr.bf16.mxu0 0
        %490 = vmatpush1.bf16.msra.mxu0 0
        %491 = vmatprep.subr.bf16.mxu0 0
        %492 = vmatpush1.bf16.msra.mxu0 0
        %493 = vmatprep.subr.bf16.mxu0 0
        %494 = vmatpush1.bf16.msra.mxu0 0
        %495 = vmatprep.subr.bf16.mxu0 0
        %496 = vmatpush1.bf16.msra.mxu0 0
        %497 = vmatprep.subr.bf16.mxu0 0
        %498 = vmatpush1.bf16.msra.mxu0 0
        %499 = vmatprep.subr.bf16.mxu0 0
        %500 = vmatpush1.bf16.msra.mxu0 0
        %501 = vmatprep.subr.bf16.mxu0 0
        %502 = vmatpush1.bf16.msra.mxu0 0
        %503 = vmatprep.subr.bf16.mxu0 0
        %504 = vmatpush1.bf16.msra.mxu0 0
        %505 = vmatprep.mubr.bf16.mxu0 0
        %506 = vmatmul.mubr.bf16.gmra.mrb[0].mxu0 %v471
        %v507 = vpop.f32.mrb[0].mxu0
        %v508 = vadd.f32 0.0, %v507
        %v509 = vpop.f32.mrb[0].mxu0
        %v510 = vpop.f32.mrb[0].mxu0
        %v511 = vpop.f32.mrb[0].mxu0
        %512 = vdwg.mxu0
        %v515 = vunpack.c.l.b16 %v451
        %v516 = vunpack.c.l.b16 %v452
        %v517 = vpack.c.b16 %v516, %v515
        %vm519 = vcmask 130048
        %v521 = vsel %vm519, %v448, 0
        %523 = vmatprep.subr.bf16.mxu0 0
        %524 = vmatpush1.bf16.msra.mxu0 %v517
        %525 = vmatprep.subr.bf16.mxu0 0
        %526 = vmatpush1.bf16.msra.mxu0 0
        %527 = vmatprep.subr.bf16.mxu0 0
        %528 = vmatpush1.bf16.msra.mxu0 0
        %529 = vmatprep.subr.bf16.mxu0 0
        %530 = vmatpush1.bf16.msra.mxu0 0
        %531 = vmatprep.subr.bf16.mxu0 0
        %532 = vmatpush1.bf16.msra.mxu0 0
        %533 = vmatprep.subr.bf16.mxu0 0
        %534 = vmatpush1.bf16.msra.mxu0 0
        %535 = vmatprep.subr.bf16.mxu0 0
        %536 = vmatpush1.bf16.msra.mxu0 0
        %537 = vmatprep.subr.bf16.mxu0 0
        %538 = vmatpush1.bf16.msra.mxu0 0
        %539 = vmatprep.subr.bf16.mxu0 0
        %540 = vmatpush1.bf16.msra.mxu0 0
        %541 = vmatprep.subr.bf16.mxu0 0
        %542 = vmatpush1.bf16.msra.mxu0 0
        %543 = vmatprep.subr.bf16.mxu0 0
        %544 = vmatpush1.bf16.msra.mxu0 0
        %545 = vmatprep.subr.bf16.mxu0 0
        %546 = vmatpush1.bf16.msra.mxu0 0
        %547 = vmatprep.subr.bf16.mxu0 0
        %548 = vmatpush1.bf16.msra.mxu0 0
        %549 = vmatprep.subr.bf16.mxu0 0
        %550 = vmatpush1.bf16.msra.mxu0 0
        %551 = vmatprep.subr.bf16.mxu0 0
        %552 = vmatpush1.bf16.msra.mxu0 0
        %553 = vmatprep.subr.bf16.mxu0 0
        %554 = vmatpush1.bf16.msra.mxu0 0
        %555 = vmatprep.mubr.bf16.mxu0 0
        %556 = vmatmul.mubr.bf16.gmra.mrb[0].mxu0 %v521
        %v557 = vpop.f32.mrb[0].mxu0
        %v558 = vadd.f32 %v508, %v557
        %v559 = vpop.f32.mrb[0].mxu0
        %v560 = vpop.f32.mrb[0].mxu0
        %v561 = vpop.f32.mrb[0].mxu0
        %562 = vdwg.mxu0
        %v563 = vld [vmem:[%s5] sm:$0x1]
        %v565 = vlaneseq
        %v566 = vshrl.u32 %v565, 7
        %v567 = vsub.s32 0, %v566
        %v568 = vrot.slane %v563, %v567
        %v570 = vadd.f32 %v558, %v568
        %v571 = vtanh.pop %v570
        %v572 = vpack.c.bf16 %v571, %v571
        %vm573 = vcmask 257024
        %574 = vst.msk [vmem:[%s445] sm:$0xf] %vm573, %v572
        %v575 = vld [vmem:[%s6] sm:$0xf]
        %v576 = vld [vmem:[%s6 + $0x4] sm:$0xf]
        %v577 = vld [vmem:[%s6 + $0x8] sm:$0xf]
        %v578 = vld [vmem:[%s6 + $0xc] sm:$0xf]
        %s579 = scalar_lea.vmem %s395, 8 [#allocation5]
        %v580 = vld [vmem:[%s579] sm:$0xff]
        %v581 = vpack.c.bf16 %v580, %v580
        %s582 = scalar_lea.vmem [#allocation6], 8
        %v583 = vld [vmem:[%s582] sm:$0xf]
        %v584 = vld [vmem:[%s582 + $0x4] sm:$0xf]
        %s585 = scalar_lea.vmem %s3, 16
        %v586 = vld [vmem:[%s585] sm:$0xf]
        %v587 = vld [vmem:[%s585 + $0x4] sm:$0xf]
        %v588 = vld [vmem:[%s585 + $0x8] sm:$0xf]
        %v589 = vld [vmem:[%s585 + $0xc] sm:$0xf]
        %v594 = vunpack.c.l.b16 %v586
        %v595 = vunpack.c.l.b16 %v587
        %v596 = vunpack.c.l.b16 %v588
        %v597 = vunpack.c.l.b16 %v589
        %v598 = vpack.c.b16 %v595, %v594
        %v599 = vpack.c.b16 %v597, %v596
        %v603 = vsel %vm469, %v581, 0
        %605 = vmatprep.subr.bf16.mxu0 0
        %606 = vmatpush1.bf16.msra.mxu0 %v598
        %607 = vmatprep.subr.bf16.mxu0 0
        %608 = vmatpush1.bf16.msra.mxu0 %v599
        %609 = vmatprep.subr.bf16.mxu0 0
        %610 = vmatpush1.bf16.msra.mxu0 0
        %611 = vmatprep.subr.bf16.mxu0 0
        %612 = vmatpush1.bf16.msra.mxu0 0
        %613 = vmatprep.subr.bf16.mxu0 0
        %614 = vmatpush1.bf16.msra.mxu0 0
        %615 = vmatprep.subr.bf16.mxu0 0
        %616 = vmatpush1.bf16.msra.mxu0 0
        %617 = vmatprep.subr.bf16.mxu0 0
        %618 = vmatpush1.bf16.msra.mxu0 0
        %619 = vmatprep.subr.bf16.mxu0 0
        %620 = vmatpush1.bf16.msra.mxu0 0
        %621 = vmatprep.subr.bf16.mxu0 0
        %622 = vmatpush1.bf16.msra.mxu0 0
        %623 = vmatprep.subr.bf16.mxu0 0
        %624 = vmatpush1.bf16.msra.mxu0 0
        %625 = vmatprep.subr.bf16.mxu0 0
        %626 = vmatpush1.bf16.msra.mxu0 0
        %627 = vmatprep.subr.bf16.mxu0 0
        %628 = vmatpush1.bf16.msra.mxu0 0
        %629 = vmatprep.subr.bf16.mxu0 0
        %630 = vmatpush1.bf16.msra.mxu0 0
        %631 = vmatprep.subr.bf16.mxu0 0
        %632 = vmatpush1.bf16.msra.mxu0 0
        %633 = vmatprep.subr.bf16.mxu0 0
        %634 = vmatpush1.bf16.msra.mxu0 0
        %635 = vmatprep.subr.bf16.mxu0 0
        %636 = vmatpush1.bf16.msra.mxu0 0
        %637 = vmatprep.mubr.bf16.mxu0 0
        %638 = vmatmul.mubr.bf16.gmra.mrb[0].mxu0 %v603
        %v639 = vpop.f32.mrb[0].mxu0
        %v640 = vadd.f32 0.0, %v639
        %v641 = vpop.f32.mrb[0].mxu0
        %v642 = vpop.f32.mrb[0].mxu0
        %v643 = vpop.f32.mrb[0].mxu0
        %644 = vdwg.mxu0
        %v647 = vunpack.c.l.b16 %v583
        %v648 = vunpack.c.l.b16 %v584
        %v649 = vpack.c.b16 %v648, %v647
        %651 = vmatprep.subr.bf16.mxu0 0
        %652 = vmatpush1.bf16.msra.mxu0 %v649
        %653 = vmatprep.subr.bf16.mxu0 0
        %654 = vmatpush1.bf16.msra.mxu0 0
        %655 = vmatprep.subr.bf16.mxu0 0
        %656 = vmatpush1.bf16.msra.mxu0 0
        %657 = vmatprep.subr.bf16.mxu0 0
        %658 = vmatpush1.bf16.msra.mxu0 0
        %659 = vmatprep.subr.bf16.mxu0 0
        %660 = vmatpush1.bf16.msra.mxu0 0
        %661 = vmatprep.subr.bf16.mxu0 0
        %662 = vmatpush1.bf16.msra.mxu0 0
        %663 = vmatprep.subr.bf16.mxu0 0
        %664 = vmatpush1.bf16.msra.mxu0 0
        %665 = vmatprep.subr.bf16.mxu0 0
        %666 = vmatpush1.bf16.msra.mxu0 0
        %667 = vmatprep.subr.bf16.mxu0 0
        %668 = vmatpush1.bf16.msra.mxu0 0
        %669 = vmatprep.subr.bf16.mxu0 0
        %670 = vmatpush1.bf16.msra.mxu0 0
        %671 = vmatprep.subr.bf16.mxu0 0
        %672 = vmatpush1.bf16.msra.mxu0 0
        %673 = vmatprep.subr.bf16.mxu0 0
        %674 = vmatpush1.bf16.msra.mxu0 0
        %675 = vmatprep.subr.bf16.mxu0 0
        %676 = vmatpush1.bf16.msra.mxu0 0
        %677 = vmatprep.subr.bf16.mxu0 0
        %678 = vmatpush1.bf16.msra.mxu0 0
        %679 = vmatprep.subr.bf16.mxu0 0
        %680 = vmatpush1.bf16.msra.mxu0 0
        %681 = vmatprep.subr.bf16.mxu0 0
        %682 = vmatpush1.bf16.msra.mxu0 0
        %683 = vmatprep.mubr.bf16.mxu0 0
        %684 = vmatmul.mubr.bf16.gmra.mrb[0].mxu0 %v521
        %v685 = vpop.f32.mrb[0].mxu0
        %v686 = vadd.f32 %v640, %v685
        %v687 = vpop.f32.mrb[0].mxu0
        %v688 = vpop.f32.mrb[0].mxu0
        %v689 = vpop.f32.mrb[0].mxu0
        %690 = vdwg.mxu0
        %s691 = scalar_lea.vmem %s5, 1
        %v692 = vld [vmem:[%s691] sm:$0x1]
        %v694 = vlaneseq
        %v695 = vshrl.u32 %v694, 7
        %v696 = vsub.s32 0, %v695
        %v697 = vrot.slane %v692, %v696
        %v699 = vadd.f32 %v686, %v697
        %v700 = vld [vmem:[#allocation8] sm:$0xf]
        %v701 = vld [vmem:[#allocation8 + $0x4] sm:$0xf]
        %v702 = vld [vmem:[#allocation8 + $0x8] sm:$0xf]
        %v703 = vld [vmem:[#allocation8 + $0xc] sm:$0xf]
        %v708 = vunpack.c.l.b16 %v700
        %v709 = vunpack.c.l.b16 %v701
        %v710 = vunpack.c.l.b16 %v702
        %v711 = vunpack.c.l.b16 %v703
        %v712 = vpack.c.b16 %v709, %v708
        %v713 = vpack.c.b16 %v711, %v710
        %v717 = vsel %vm469, %v572, 0
        %719 = vmatprep.subr.bf16.mxu0 0
        %720 = vmatpush1.bf16.msra.mxu0 %v712
        %721 = vmatprep.subr.bf16.mxu0 0
        %722 = vmatpush1.bf16.msra.mxu0 %v713
        %723 = vmatprep.subr.bf16.mxu0 0
        %724 = vmatpush1.bf16.msra.mxu0 0
        %725 = vmatprep.subr.bf16.mxu0 0
        %726 = vmatpush1.bf16.msra.mxu0 0
        %727 = vmatprep.subr.bf16.mxu0 0
        %728 = vmatpush1.bf16.msra.mxu0 0
        %729 = vmatprep.subr.bf16.mxu0 0
        %730 = vmatpush1.bf16.msra.mxu0 0
        %731 = vmatprep.subr.bf16.mxu0 0
        %732 = vmatpush1.bf16.msra.mxu0 0
        %733 = vmatprep.subr.bf16.mxu0 0
        %734 = vmatpush1.bf16.msra.mxu0 0
        %735 = vmatprep.subr.bf16.mxu0 0
        %736 = vmatpush1.bf16.msra.mxu0 0
        %737 = vmatprep.subr.bf16.mxu0 0
        %738 = vmatpush1.bf16.msra.mxu0 0
        %739 = vmatprep.subr.bf16.mxu0 0
        %740 = vmatpush1.bf16.msra.mxu0 0
        %741 = vmatprep.subr.bf16.mxu0 0
        %742 = vmatpush1.bf16.msra.mxu0 0
        %743 = vmatprep.subr.bf16.mxu0 0
        %744 = vmatpush1.bf16.msra.mxu0 0
        %745 = vmatprep.subr.bf16.mxu0 0
        %746 = vmatpush1.bf16.msra.mxu0 0
        %747 = vmatprep.subr.bf16.mxu0 0
        %748 = vmatpush1.bf16.msra.mxu0 0
        %749 = vmatprep.subr.bf16.mxu0 0
        %750 = vmatpush1.bf16.msra.mxu0 0
        %751 = vmatprep.mubr.bf16.mxu0 0
        %752 = vmatmul.mubr.bf16.gmra.mrb[0].mxu0 %v717
        %v753 = vpop.f32.mrb[0].mxu0
        %v754 = vadd.f32 0.0, %v753
        %v755 = vpop.f32.mrb[0].mxu0
        %v756 = vpop.f32.mrb[0].mxu0
        %v757 = vpop.f32.mrb[0].mxu0
        %758 = vdwg.mxu0
        %v759 = vadd.f32 %v699, %v754
        %v760 = vtanh.pop %v759
        %v761 = vpack.c.bf16 %v760, %v760
        %s762 = scalar_lea.vmem %s445, 4 [#allocation10]
        %763 = vst.msk [vmem:[%s762] sm:$0xf] %vm573, %v761
        %s764 = scalar_lea.vmem %s6, 16
        %v765 = vld [vmem:[%s764] sm:$0xf]
        %v766 = vld [vmem:[%s764 + $0x4] sm:$0xf]
        %v767 = vld [vmem:[%s764 + $0x8] sm:$0xf]
        %v768 = vld [vmem:[%s764 + $0xc] sm:$0xf]
        %v773 = vunpack.c.l.b16 %v765
        %v774 = vunpack.c.l.b16 %v766
        %v775 = vunpack.c.l.b16 %v767
        %v776 = vunpack.c.l.b16 %v768
        %v777 = vpack.c.b16 %v774, %v773
        %v778 = vpack.c.b16 %v776, %v775
        %v782 = vsel %vm469, %v761, 0
        %784 = vmatprep.subr.bf16.mxu0 0
        %785 = vmatpush1.bf16.msra.mxu0 %v777
        %786 = vmatprep.subr.bf16.mxu0 0
        %787 = vmatpush1.bf16.msra.mxu0 %v778
        %788 = vmatprep.subr.bf16.mxu0 0
        %789 = vmatpush1.bf16.msra.mxu0 0
        %790 = vmatprep.subr.bf16.mxu0 0
        %791 = vmatpush1.bf16.msra.mxu0 0
        %792 = vmatprep.subr.bf16.mxu0 0
        %793 = vmatpush1.bf16.msra.mxu0 0
        %794 = vmatprep.subr.bf16.mxu0 0
        %795 = vmatpush1.bf16.msra.mxu0 0
        %796 = vmatprep.subr.bf16.mxu0 0
        %797 = vmatpush1.bf16.msra.mxu0 0
        %798 = vmatprep.subr.bf16.mxu0 0
        %799 = vmatpush1.bf16.msra.mxu0 0
        %800 = vmatprep.subr.bf16.mxu0 0
        %801 = vmatpush1.bf16.msra.mxu0 0
        %802 = vmatprep.subr.bf16.mxu0 0
        %803 = vmatpush1.bf16.msra.mxu0 0
        %804 = vmatprep.subr.bf16.mxu0 0
        %805 = vmatpush1.bf16.msra.mxu0 0
        %806 = vmatprep.subr.bf16.mxu0 0
        %807 = vmatpush1.bf16.msra.mxu0 0
        %808 = vmatprep.subr.bf16.mxu0 0
        %809 = vmatpush1.bf16.msra.mxu0 0
        %810 = vmatprep.subr.bf16.mxu0 0
        %811 = vmatpush1.bf16.msra.mxu0 0
        %812 = vmatprep.subr.bf16.mxu0 0
        %813 = vmatpush1.bf16.msra.mxu0 0
        %814 = vmatprep.subr.bf16.mxu0 0
        %815 = vmatpush1.bf16.msra.mxu0 0
        %816 = vmatprep.mubr.bf16.mxu0 0
        %817 = vmatmul.mubr.bf16.gmra.mrb[0].mxu0 %v782
        %v818 = vpop.f32.mrb[0].mxu0
        %v819 = vadd.f32 0.0, %v818
        %v820 = vpop.f32.mrb[0].mxu0
        %v821 = vpop.f32.mrb[0].mxu0
        %v822 = vpop.f32.mrb[0].mxu0
        %823 = vdwg.mxu0
        %v828 = vunpack.c.l.b16 %v575
        %v829 = vunpack.c.l.b16 %v576
        %v830 = vunpack.c.l.b16 %v577
        %v831 = vunpack.c.l.b16 %v578
        %v832 = vpack.c.b16 %v829, %v828
        %v833 = vpack.c.b16 %v831, %v830
        %836 = vmatprep.subr.bf16.mxu0 0
        %837 = vmatpush1.bf16.msra.mxu0 %v832
        %838 = vmatprep.subr.bf16.mxu0 0
        %839 = vmatpush1.bf16.msra.mxu0 %v833
        %840 = vmatprep.subr.bf16.mxu0 0
        %841 = vmatpush1.bf16.msra.mxu0 0
        %842 = vmatprep.subr.bf16.mxu0 0
        %843 = vmatpush1.bf16.msra.mxu0 0
        %844 = vmatprep.subr.bf16.mxu0 0
        %845 = vmatpush1.bf16.msra.mxu0 0
        %846 = vmatprep.subr.bf16.mxu0 0
        %847 = vmatpush1.bf16.msra.mxu0 0
        %848 = vmatprep.subr.bf16.mxu0 0
        %849 = vmatpush1.bf16.msra.mxu0 0
        %850 = vmatprep.subr.bf16.mxu0 0
        %851 = vmatpush1.bf16.msra.mxu0 0
        %852 = vmatprep.subr.bf16.mxu0 0
        %853 = vmatpush1.bf16.msra.mxu0 0
        %854 = vmatprep.subr.bf16.mxu0 0
        %855 = vmatpush1.bf16.msra.mxu0 0
        %856 = vmatprep.subr.bf16.mxu0 0
        %857 = vmatpush1.bf16.msra.mxu0 0
        %858 = vmatprep.subr.bf16.mxu0 0
        %859 = vmatpush1.bf16.msra.mxu0 0
        %860 = vmatprep.subr.bf16.mxu0 0
        %861 = vmatpush1.bf16.msra.mxu0 0
        %862 = vmatprep.subr.bf16.mxu0 0
        %863 = vmatpush1.bf16.msra.mxu0 0
        %864 = vmatprep.subr.bf16.mxu0 0
        %865 = vmatpush1.bf16.msra.mxu0 0
        %866 = vmatprep.subr.bf16.mxu0 0
        %867 = vmatpush1.bf16.msra.mxu0 0
        %868 = vmatprep.mubr.bf16.mxu0 0
        %869 = vmatmul.mubr.bf16.gmra.mrb[0].mxu0 %v717
        %v870 = vpop.f32.mrb[0].mxu0
        %v871 = vadd.f32 %v819, %v870
        %v872 = vpop.f32.mrb[0].mxu0
        %v873 = vpop.f32.mrb[0].mxu0
        %v874 = vpop.f32.mrb[0].mxu0
        %875 = vdwg.mxu0
        %v876 = vld [vmem:[%s7] sm:$0x1]
        %v878 = vlaneseq
        %v879 = vshrl.u32 %v878, 7
        %v880 = vsub.s32 0, %v879
        %v881 = vrot.slane %v876, %v880
        %v883 = vadd.f32 %v871, %v881
        %v884 = vpack.c.bf16 %v883, %v883
        %vm885 = vcmask 125952
        %886 = vst.msk [vmem:[%s438] sm:$0xf] %vm885, %v884
        %s887 = sand.u32 %s217, 1
        %s888 = scalar_lea.sflag [#allocation4], %s887
        %s889 = sand.u32 %s217, 1
        %s890 = smul.addr %s889, 4
        %s891 = scalar_lea.vmem [#allocation9], %s890
        %s892 = sand.u32 %s243, 1
        %s893 = scalar_lea.sflag [#allocation11], %s892
        %s894 = sand.u32 %s243, 1
        %s895 = smul.addr %s894, 8
        %s896 = scalar_lea.vmem [#allocation10], %s895
        // Predicated region
        $region103: #{rnn_forward.1} parent=85 // pred_check
          %p897 = pneg %p227
        $region104: #{rnn_forward.1} parent=85 // pred_check_branch
          %899 = sbr.rel (%p897) target = $region106
        $region105: #{rnn_forward.1} parent=85 // pred_region
          %s901 = ssub.s32 64, 64
          %902 = vsyncadd %s888, %s901
          %s903 = smul.addr %s31, 64
          %s904 = scalar_lea.hbm %s8, %s903
          %s906 = sshll.u32 %s891, 4
          %s907 = int_to_ptr.vmem [resolvable:$true] %s906
          %909 = dma.vmem_to_hbm [thread:$0]  %s907, 64, %s904, %s888
        $region106: #{rnn_forward.1} parent=85 // pred_fallthru
          _
        // Predicated region
        $region107: #{rnn_forward.1} parent=85 // pred_check
          %p910 = pneg %p253
        $region108: #{rnn_forward.1} parent=85 // pred_check_branch
          %912 = sbr.rel (%p910) target = $region110
        $region109: #{rnn_forward.1} parent=85 // pred_region
          %s914 = ssub.s32 128, 128
          %915 = vsyncadd %s893, %s914
          %s916 = smul.addr %s31, 64
          %s917 = scalar_lea.hbm %s9, %s916
          %s918 = sshll.u32 %s896, 4
          %s919 = int_to_ptr.vmem [resolvable:$true] %s918
          %924 = dma.vmem_to_hbm [thread:$0]  %s919, 128, %s917, %s893, 64, 128, 4
        $region110: #{rnn_forward.1} parent=85 // pred_fallthru
          _
      $region86: #{rnn_forward.1} parent=5 // pred_fallthru
        _
      %p925 = scmp.le.s32.totalorder 2, %s26
      // Predicated region
      $region111: #{rnn_forward.1} parent=5 // pred_check
        %p926 = pneg %p925
      $region112: #{rnn_forward.1} parent=5 // pred_check_branch
        %928 = sbr.rel (%p926) target = $region114
      $region113: #{rnn_forward.1} parent=5 // pred_region
        %s929 = ssub.s32 %s26, 2
        // Predicated region
        $region115: #{rnn_forward.1} parent=113 // pred_check
          %p930 = pneg %p233
        $region116: #{rnn_forward.1} parent=113 // pred_check_branch
          %932 = sbr.rel (%p930) target = $region118
        $region117: #{rnn_forward.1} parent=113 // pred_region
          %s933 = sand.u32 %s218, 1
          %s934 = scalar_lea.sflag [#allocation4], %s933
          %s935 = sand.u32 %s218, 1
          %s936 = smul.addr %s935, 4
          %s937 = scalar_lea.vmem [#allocation9], %s936
          %938 = dma.done %s934, 64
        $region118: #{rnn_forward.1} parent=113 // pred_fallthru
          _
        // Predicated region
        $region119: #{rnn_forward.1} parent=113 // pred_check
          %p939 = pneg %p259
        $region120: #{rnn_forward.1} parent=113 // pred_check_branch
          %941 = sbr.rel (%p939) target = $region122
        $region121: #{rnn_forward.1} parent=113 // pred_region
          %s942 = sand.u32 %s244, 1
          %s943 = scalar_lea.sflag [#allocation11], %s942
          %s944 = sand.u32 %s244, 1
          %s945 = smul.addr %s944, 8
          %s946 = scalar_lea.vmem [#allocation10], %s945
          %947 = dma.done %s943, 128
        $region122: #{rnn_forward.1} parent=113 // pred_fallthru
          _
      $region114: #{rnn_forward.1} parent=5 // pred_fallthru
        _
    $region6: #{rnn_forward.1} parent=1 // loop_footer
      %s30 = sadd.s32 1, %s26
    $region7: #{rnn_forward.1} parent=1 // loop_footer_branch
      %25 = sbr.rel target = $region3
    $region8: #{rnn_forward.1} parent=1 // loop_exit
      _
    %948 = vsyncpa [#allocation3], 1
    %s949 = scalar_lea.sflag [#allocation3], 1
    %950 = vsyncpa %s949, 1
    %951 = vsyncpa [#allocation7], 1
    %952 = vsyncpa [#allocation4], 1
    %s953 = scalar_lea.sflag [#allocation4], 1
    %954 = vsyncpa %s953, 1
    %955 = vsyncpa [#allocation11], 1
    %s956 = scalar_lea.sflag [#allocation11], 1
    %957 = vsyncpa %s956, 1

</llo_original>
